<compile_context>
chip_gen: v6e
topology: v6e:2x2x1
jax: 0.10.0
libtpu: 0.0.40
codegen_flags: <defaults>
</compile_context>

<pallas_src>
import jax
import jax.numpy as jnp
from jax.experimental import pallas as pl
from jax.experimental.pallas import tpu as pltpu


def _round_up(x, m):
    return ((x + m - 1) // m) * m


def _mlp_kernel(x_ref, w1_ref, b1_ref, w2_ref, b2_ref, o_ref):
    # x:  [TB, Din]   w1: [Din, Hp]   b1: [1, Hp]
    # w2: [Hp, Cout]  b2: [1, Cout]   o:  [TB, Cout]
    h = jnp.dot(x_ref[...], w1_ref[...], preferred_element_type=jnp.float32)
    h = jnp.maximum(h + b1_ref[...], 0.0)                 # bias + ReLU in f32 (VPU)
    o = jnp.dot(h.astype(w2_ref.dtype), w2_ref[...],
                preferred_element_type=jnp.float32) + b2_ref[...]
    o_ref[...] = jnp.tanh(o)                              # tanh on EUP, f32 store


def prepare_params(params, *, matmul_dtype=jnp.bfloat16, lane_dense_out=False):
    """One-time weight prep (hoisted out of the forward path).

    Weights stored as [in_features, out_features].  Hidden dim is zero-padded
    to a multiple of 128; the output dim stays at n_cls (narrow writeback)
    unless lane_dense_out=True (128-lane-padded output, the v7x alternative).
    Matmul operands are cast to `matmul_dtype` (bf16 = native MXU dtype on
    v6e/v7x); biases stay f32.
    """
    w1, b1, w2, b2 = params
    hidden = w1.shape[1]
    n_cls = w2.shape[1]
    Hp = _round_up(hidden, 128)
    Cout = _round_up(n_cls, 128) if lane_dense_out else n_cls

    w1p = jnp.pad(w1, ((0, 0), (0, Hp - hidden))).astype(matmul_dtype)        # [Din, Hp]
    b1p = jnp.pad(b1[None, :].astype(jnp.float32), ((0, 0), (0, Hp - hidden)))
    w2p = jnp.pad(w2, ((0, Hp - hidden), (0, Cout - n_cls))).astype(matmul_dtype)
    b2p = jnp.pad(b2[None, :].astype(jnp.float32), ((0, 0), (0, Cout - n_cls)))
    return (w1p, b1p, w2p, b2p)


def generator_drgcn_forward(z, y, prepared, *, tb_target=4096):
    """z: [B, 20], y: [B, n_cls]. Returns [B, n_cls] float32."""
    w1, b1, w2, b2 = prepared
    B = z.shape[0]
    n_cls = y.shape[1]
    Din = z.shape[1] + n_cls
    Hp = w1.shape[1]
    Cout = w2.shape[1]
    assert w1.shape[0] == Din

    # Concat z|y (tiny, fuses under jit) and cast to the matmul operand dtype.
    x = jnp.concatenate([z, y], axis=1).astype(w1.dtype)

    # Batch tiling: biggest tile up to tb_target, multiple of 8, but keep at
    # least 2 grid steps whenever the batch allows it (megacore on v7x +
    # pipeline overlap).  VMEM is nowhere near binding at TB=4096.
    B8 = _round_up(B, 8)
    two_step_cap = max(8, (B8 // 2) // 8 * 8) if B8 >= 16 else B8
    TB = min(tb_target, two_step_cap)
    Bp = _round_up(B8, TB)
    if Bp != B:
        # Padded rows produce garbage (tanh(relu(b1)@w2+b2)); sliced off below.
        x = jnp.pad(x, ((0, Bp - B), (0, 0)))

    out_p = pl.pallas_call(
        _mlp_kernel,
        out_shape=jax.ShapeDtypeStruct((Bp, Cout), jnp.float32),
        grid=(Bp // TB,),
        in_specs=[
            pl.BlockSpec((TB, Din), lambda i: (i, 0)),   # activations: pipelined per step
            pl.BlockSpec((Din, Hp), lambda i: (0, 0)),   # weights/biases: constant index_map
            pl.BlockSpec((1, Hp), lambda i: (0, 0)),     #   -> VMEM-resident across steps
            pl.BlockSpec((Hp, Cout), lambda i: (0, 0)),
            pl.BlockSpec((1, Cout), lambda i: (0, 0)),
        ],
        out_specs=pl.BlockSpec((TB, Cout), lambda i: (i, 0)),
        compiler_params=pltpu.CompilerParams(
            dimension_semantics=("parallel",),           # shard grid across TCs on v7x
            vmem_limit_bytes=32 * 1024 * 1024,
        ),
    )(x, w1, b1, w2, b2)

    # Always slice: padded batch rows are invalid; in lane-dense mode the extra
    # output lanes are padding.  (No-op column slice in narrow mode.)
    return out_p[:B, :n_cls]


def init_params(key, n_cls):
    """Deterministic init mirroring nn.Linear shapes.
    fc1: Linear(20 + n_cls, 100); fc2: Linear(100, n_cls).
    Weights stored as [in_features, out_features]."""
    d_in = 20 + n_cls
    hidden = 100
    k1, k2, k3, k4 = jax.random.split(key, 4)
    lim1 = 1.0 / (d_in ** 0.5)
    lim2 = 1.0 / (hidden ** 0.5)
    w1 = jax.random.uniform(k1, (d_in, hidden), jnp.float32, -lim1, lim1)
    b1 = jax.random.uniform(k2, (hidden,), jnp.float32, -lim1, lim1)
    w2 = jax.random.uniform(k3, (hidden, n_cls), jnp.float32, -lim2, lim2)
    b2 = jax.random.uniform(k4, (n_cls,), jnp.float32, -lim2, lim2)
    return (w1, b1, w2, b2)


def reference_forward(z, y, params):
    w1, b1, w2, b2 = params
    x = jnp.concatenate([z, y], axis=1)
    h = jnp.maximum(x @ w1 + b1, 0.0)
    return jnp.tanh(h @ w2 + b2)


if __name__ == "__main__":
    n_cls = 4
    key = jax.random.PRNGKey(0)
    kz, kp = jax.random.split(key, 2)
    params = init_params(kp, n_cls)

    fwd = jax.jit(generator_drgcn_forward, static_argnames=("tb_target",))

    def run_case(batch, matmul_dtype, lane_dense_out, tol):
        kz2, ky2 = jax.random.split(jax.random.fold_in(kz, batch))
        z = jax.random.normal(kz2, (batch, 20), jnp.float32)          # latent noise
        y = jax.nn.one_hot(jax.random.randint(ky2, (batch,), 0, n_cls),
                           n_cls, dtype=jnp.float32)                  # class conditioning
        prepared = prepare_params(params, matmul_dtype=matmul_dtype,
                                  lane_dense_out=lane_dense_out)
        out = jax.block_until_ready(fwd(z, y, prepared))
        ref = reference_forward(z, y, params)
        assert out.shape == (batch, n_cls) and out.dtype == jnp.float32
        err = float(jnp.max(jnp.abs(out - ref)))
        assert err < tol, (batch, str(matmul_dtype), lane_dense_out, err)

    # f32 operands, narrow output (tolerance allows MXU default-precision passes).
    run_case(8, jnp.float32, False, 5e-3)
    # bf16 operands (v6e/v7x default), batch not 8/TB-aligned -> row padding +
    # multi-step grid path exercised.
    run_case(33, jnp.bfloat16, False, 5e-2)
    # lane-dense 128-wide output variant (the v7x alternative).
    run_case(8, jnp.bfloat16, True, 5e-2)

    print("KERNEL_OK")
</pallas_src>

<mosaic_0001>
module attributes {stable_mosaic.version = 11 : i64} {
  func.func @_mlp_kernel(%arg0: i32, %arg1: memref<8x24xf32, #tpu.memory_space<vmem>>, %arg2: memref<24x128xf32, #tpu.memory_space<vmem>>, %arg3: memref<1x128xf32, #tpu.memory_space<vmem>>, %arg4: memref<128x4xf32, #tpu.memory_space<vmem>>, %arg5: memref<1x4xf32, #tpu.memory_space<vmem>>, %arg6: memref<8x4xf32, #tpu.memory_space<vmem>>) attributes {dimension_semantics = [#tpu.dimension_semantics<parallel>], iteration_bounds = array<i64: 1>, scalar_prefetch = 0 : i64, scratch_operands = 0 : i64, tpu.core_type = #tpu.core_type<tc>, window_params = [{transform_indices = @transform_0, window_bounds = array<i64: 8, 24>}, {pipeline_mode = #tpu.pipeline_mode<synchronous>, transform_indices = @transform_1, window_bounds = array<i64: 24, 128>}, {pipeline_mode = #tpu.pipeline_mode<synchronous>, transform_indices = @transform_2, window_bounds = array<i64: 1, 128>}, {pipeline_mode = #tpu.pipeline_mode<synchronous>, transform_indices = @transform_3, window_bounds = array<i64: 128, 4>}, {pipeline_mode = #tpu.pipeline_mode<synchronous>, transform_indices = @transform_4, window_bounds = array<i64: 1, 4>}, {transform_indices = @transform_5, window_bounds = array<i64: 8, 4>}]} {
    %c0 = arith.constant 0 : index
    %c0_0 = arith.constant 0 : index
    %0 = vector.load %arg1[%c0, %c0_0] : memref<8x24xf32, #tpu.memory_space<vmem>>, vector<8x24xf32>
    %c0_1 = arith.constant 0 : index
    %c0_2 = arith.constant 0 : index
    %1 = vector.load %arg2[%c0_1, %c0_2] : memref<24x128xf32, #tpu.memory_space<vmem>>, vector<24x128xf32>
    %cst = arith.constant dense<0.000000e+00> : vector<8x128xf32>
    %2 = tpu.matmul %0, %1, %cst {dimension_numbers = #tpu.dot_dimension_numbers<[1], [0], [0], [1], [0, 0, 1, 1], [], []>} : vector<8x24xf32>, vector<24x128xf32>, vector<8x128xf32> -> vector<8x128xf32>
    %c0_3 = arith.constant 0 : index
    %c0_4 = arith.constant 0 : index
    %3 = vector.load %arg3[%c0_3, %c0_4] : memref<1x128xf32, #tpu.memory_space<vmem>>, vector<1x128xf32>
    %4 = vector.broadcast %3 : vector<1x128xf32> to vector<8x128xf32>
    %5 = arith.addf %2, %4 : vector<8x128xf32>
    %cst_5 = arith.constant 0.000000e+00 : f32
    %6 = vector.broadcast %cst_5 : f32 to vector<8x128xf32>
    %7 = arith.maximumf %5, %6 : vector<8x128xf32>
    %c0_6 = arith.constant 0 : index
    %c0_7 = arith.constant 0 : index
    %8 = vector.load %arg4[%c0_6, %c0_7] : memref<128x4xf32, #tpu.memory_space<vmem>>, vector<128x4xf32>
    %cst_8 = arith.constant dense<0.000000e+00> : vector<8x4xf32>
    %9 = tpu.matmul %7, %8, %cst_8 {dimension_numbers = #tpu.dot_dimension_numbers<[1], [0], [0], [1], [0, 0, 1, 1], [], []>} : vector<8x128xf32>, vector<128x4xf32>, vector<8x4xf32> -> vector<8x4xf32>
    %c0_9 = arith.constant 0 : index
    %c0_10 = arith.constant 0 : index
    %10 = vector.load %arg5[%c0_9, %c0_10] : memref<1x4xf32, #tpu.memory_space<vmem>>, vector<1x4xf32>
    %11 = vector.broadcast %10 : vector<1x4xf32> to vector<8x4xf32>
    %12 = arith.addf %9, %11 : vector<8x4xf32>
    %13 = math.tanh %12 : vector<8x4xf32>
    %c0_11 = arith.constant 0 : index
    %c0_12 = arith.constant 0 : index
    %14 = vector.load %arg6[%c0_11, %c0_12] : memref<8x4xf32, #tpu.memory_space<vmem>>, vector<8x4xf32>
    tpu.vector_store %arg6[%c0_11, %c0_12], %13 {strides = array<i32>} : memref<8x4xf32, #tpu.memory_space<vmem>>, vector<8x4xf32>,
    return
  }
  func.func @transform_0(%arg0: i32) -> (i32, i32) {
    %c0_i32 = arith.constant 0 : i32
    %c0_i32_0 = arith.constant 0 : i32
    return %arg0, %c0_i32 : i32, i32
  }
  func.func @transform_1(%arg0: i32) -> (i32, i32) {
    %c0_i32 = arith.constant 0 : i32
    %c0_i32_0 = arith.constant 0 : i32
    %c0_i32_1 = arith.constant 0 : i32
    return %c0_i32, %c0_i32_0 : i32, i32
  }
  func.func @transform_2(%arg0: i32) -> (i32, i32) {
    %c0_i32 = arith.constant 0 : i32
    %c0_i32_0 = arith.constant 0 : i32
    %c0_i32_1 = arith.constant 0 : i32
    return %c0_i32, %c0_i32_0 : i32, i32
  }
  func.func @transform_3(%arg0: i32) -> (i32, i32) {
    %c0_i32 = arith.constant 0 : i32
    %c0_i32_0 = arith.constant 0 : i32
    %c0_i32_1 = arith.constant 0 : i32
    return %c0_i32, %c0_i32_0 : i32, i32
  }
  func.func @transform_4(%arg0: i32) -> (i32, i32) {
    %c0_i32 = arith.constant 0 : i32
    %c0_i32_0 = arith.constant 0 : i32
    %c0_i32_1 = arith.constant 0 : i32
    return %c0_i32, %c0_i32_0 : i32, i32
  }
  func.func @transform_5(%arg0: i32) -> (i32, i32) {
    %c0_i32 = arith.constant 0 : i32
    %c0_i32_0 = arith.constant 0 : i32
    return %arg0, %c0_i32 : i32, i32
  }
}

</mosaic_0001>

<llo_original>
// kernel: generator_drgcn_forward.1
$region0: #{generator_drgcn_forward.1}
  #allocation0 [shape = 'u32[]', space=smem, size = 0x4, offset = 0x4, fixed_abs, tag = 'smem constant byte address 0x4 - core index']
  #allocation1 [shape = 'u32[144,128]{1,0:T(1,128)}', space=vmem, size = 0x12000, scoped, tag = 'internal scratch']
  %s0 = inlined_call_operand.vmem [shape: f32[8,24], index: 0, kind: input, shape index: {}]
  %s1 = inlined_call_operand.vmem [shape: f32[24,128], index: 1, kind: input, shape index: {}]
  %s2 = inlined_call_operand.vmem [shape: f32[1,128], index: 2, kind: input, shape index: {}]
  %s3 = inlined_call_operand.vmem [shape: f32[128,4], index: 3, kind: input, shape index: {}]
  %s4 = inlined_call_operand.vmem [shape: f32[1,4], index: 4, kind: input, shape index: {}]
  %s5 = inlined_call_operand.vmem [shape: f32[8,4], index: 5, kind: output, shape index: {}]
  %s6 = sld [smem:[#allocation0]]
  $region30: #{generator_drgcn_forward.1} parent=0
    _
  %s8 = ssub.s32 1, %s6
  %s9 = scalar_select 0, %s8, %s6
  // Predicated region
  $region2: #{generator_drgcn_forward.1} parent=0 // pred_check
    _
  $region3: #{generator_drgcn_forward.1} parent=0 // pred_check_branch
    %11 = sbr.rel (0) target = $region5
  $region4: #{generator_drgcn_forward.1} parent=0 // pred_region
    _
  $region5: #{generator_drgcn_forward.1} parent=0 // pred_fallthru
    _
  // Predicated region
  $region6: #{generator_drgcn_forward.1} parent=0 // pred_check
    _
  $region7: #{generator_drgcn_forward.1} parent=0 // pred_check_branch
    %13 = sbr.rel (0) target = $region9
  $region8: #{generator_drgcn_forward.1} parent=0 // pred_region
    _
  $region9: #{generator_drgcn_forward.1} parent=0 // pred_fallthru
    _
  // Predicated region
  $region10: #{generator_drgcn_forward.1} parent=0 // pred_check
    _
  $region11: #{generator_drgcn_forward.1} parent=0 // pred_check_branch
    %15 = sbr.rel (0) target = $region13
  $region12: #{generator_drgcn_forward.1} parent=0 // pred_region
    _
  $region13: #{generator_drgcn_forward.1} parent=0 // pred_fallthru
    _
  // Predicated region
  $region14: #{generator_drgcn_forward.1} parent=0 // pred_check
    _
  $region15: #{generator_drgcn_forward.1} parent=0 // pred_check_branch
    %17 = sbr.rel (0) target = $region17
  $region16: #{generator_drgcn_forward.1} parent=0 // pred_region
    _
  $region17: #{generator_drgcn_forward.1} parent=0 // pred_fallthru
    _
  // Predicated region
  $region18: #{generator_drgcn_forward.1} parent=0 // pred_check
    _
  $region19: #{generator_drgcn_forward.1} parent=0 // pred_check_branch
    %19 = sbr.rel (0) target = $region21
  $region20: #{generator_drgcn_forward.1} parent=0 // pred_region
    _
  $region21: #{generator_drgcn_forward.1} parent=0 // pred_fallthru
    _
  %v20 = vld [vmem:[%s0] sm:$0xff]
  %v21 = vld [vmem:[%s1] sm:$0xff]
  %v22 = vld [vmem:[%s1 + $0x8] sm:$0xff]
  %v23 = vld [vmem:[%s1 + $0x10] sm:$0xff]
  %v24 = vld [vmem:[%s2] sm:$0x1]
  %v26 = vlaneseq
  %v27 = vshrl.u32 %v26, 7
  %v28 = vsub.s32 0, %v27
  %v29 = vrot.slane %v24, %v28
  %vm31 = vcmask 195584
  %v33 = vsel %vm31, %v20, 0
  %35 = vmatprep.subr.mxu0 0.0
  %36 = vmatpush1.msra.mxu0 0.0
  %37 = vmatprep.subr.mxu0 0.0
  %38 = vmatpush1.msra.mxu0 0.0
  %39 = vmatprep.subr.mxu0 0.0
  %40 = vmatpush1.msra.mxu0 0.0
  %41 = vmatprep.subr.mxu0 0.0
  %42 = vmatpush1.msra.mxu0 0.0
  %43 = vmatprep.subr.mxu0 0.0
  %44 = vmatpush1.msra.mxu0 0.0
  %45 = vmatprep.subr.mxu0 0.0
  %46 = vmatpush1.msra.mxu0 0.0
  %47 = vmatprep.subr.mxu0 0.0
  %48 = vmatpush1.msra.mxu0 0.0
  %49 = vmatprep.subr.mxu0 0.0
  %50 = vmatpush1.msra.mxu0 0.0
  %51 = vmatprep.subr.mxu0 0.0
  %52 = vmatpush1.msra.mxu0 0.0
  %53 = vmatprep.subr.mxu0 0.0
  %54 = vmatpush1.msra.mxu0 0.0
  %55 = vmatprep.subr.mxu0 0.0
  %56 = vmatpush1.msra.mxu0 0.0
  %57 = vmatprep.subr.mxu0 0.0
  %58 = vmatpush1.msra.mxu0 0.0
  %59 = vmatprep.subr.mxu0 0.0
  %60 = vmatpush1.msra.mxu0 0.0
  %61 = vmatprep.subr.mxu0 0.0
  %62 = vmatpush1.msra.mxu0 %v23
  %63 = vmatprep.subr.mxu0 0.0
  %64 = vmatpush1.msra.mxu0 %v22
  %65 = vmatprep.subr.mxu0 0.0
  %66 = vmatpush1.msra.mxu0 %v21
  %67 = vmatprep.subr.mxu0 0.0
  %68 = vmatpush2.msra.mxu0 0.0
  %69 = vmatprep.subr.mxu0 0.0
  %70 = vmatpush2.msra.mxu0 0.0
  %71 = vmatprep.subr.mxu0 0.0
  %72 = vmatpush2.msra.mxu0 0.0
  %73 = vmatprep.subr.mxu0 0.0
  %74 = vmatpush2.msra.mxu0 0.0
  %75 = vmatprep.subr.mxu0 0.0
  %76 = vmatpush2.msra.mxu0 0.0
  %77 = vmatprep.subr.mxu0 0.0
  %78 = vmatpush2.msra.mxu0 0.0
  %79 = vmatprep.subr.mxu0 0.0
  %80 = vmatpush2.msra.mxu0 0.0
  %81 = vmatprep.subr.mxu0 0.0
  %82 = vmatpush2.msra.mxu0 0.0
  %83 = vmatprep.subr.mxu0 0.0
  %84 = vmatpush2.msra.mxu0 0.0
  %85 = vmatprep.subr.mxu0 0.0
  %86 = vmatpush2.msra.mxu0 0.0
  %87 = vmatprep.subr.mxu0 0.0
  %88 = vmatpush2.msra.mxu0 0.0
  %89 = vmatprep.subr.mxu0 0.0
  %90 = vmatpush2.msra.mxu0 0.0
  %91 = vmatprep.subr.mxu0 0.0
  %92 = vmatpush2.msra.mxu0 0.0
  %93 = vmatprep.subr.mxu0 0.0
  %94 = vmatpush2.msra.mxu0 0.0
  %95 = vmatprep.subr.mxu0 0.0
  %96 = vmatpush2.msra.mxu0 0.0
  %97 = vmatprep.subr.mxu0 0.0
  %98 = vmatpush2.msra.mxu0 0.0
  %99 = vmatprep.mubr.f32.mxu0 0.0
  %100 = vmatmul.mubr.f32.gmra.mxu0 %v33
  %v101 = vpop.f32.mrf.mxu0
  %v102 = vadd.f32 %v29, %v101
  %v103 = vpop.f32.mrf.mxu0
  %104 = vdwg.mxu0
  %v105 = vmax.f32 %v102, 0.0
  %v106 = vld [vmem:[%s3] sm:$0xff]
  %v107 = vld [vmem:[%s3 + $0x8] sm:$0xff]
  %v108 = vld [vmem:[%s3 + $0x10] sm:$0xff]
  %v109 = vld [vmem:[%s3 + $0x18] sm:$0xff]
  %v110 = vld [vmem:[%s3 + $0x20] sm:$0xff]
  %v111 = vld [vmem:[%s3 + $0x28] sm:$0xff]
  %v112 = vld [vmem:[%s3 + $0x30] sm:$0xff]
  %v113 = vld [vmem:[%s3 + $0x38] sm:$0xff]
  %v114 = vld [vmem:[%s3 + $0x40] sm:$0xff]
  %v115 = vld [vmem:[%s3 + $0x48] sm:$0xff]
  %v116 = vld [vmem:[%s3 + $0x50] sm:$0xff]
  %v117 = vld [vmem:[%s3 + $0x58] sm:$0xff]
  %v118 = vld [vmem:[%s3 + $0x60] sm:$0xff]
  %v119 = vld [vmem:[%s3 + $0x68] sm:$0xff]
  %v120 = vld [vmem:[%s3 + $0x70] sm:$0xff]
  %v121 = vld [vmem:[%s3 + $0x78] sm:$0xff]
  %v122 = vld [vmem:[%s4] sm:$0x1]
  %v124 = vlaneseq
  %v125 = vshrl.u32 %v124, 7
  %v126 = vsub.s32 0, %v125
  %v127 = vrot.slane %v122, %v126
  %129 = vmatprep.subr.mxu0 0.0
  %130 = vmatpush1.msra.mxu0 %v121
  %131 = vmatprep.subr.mxu0 0.0
  %132 = vmatpush1.msra.mxu0 %v120
  %133 = vmatprep.subr.mxu0 0.0
  %134 = vmatpush1.msra.mxu0 %v119
  %135 = vmatprep.subr.mxu0 0.0
  %136 = vmatpush1.msra.mxu0 %v118
  %137 = vmatprep.subr.mxu0 0.0
  %138 = vmatpush1.msra.mxu0 %v117
  %139 = vmatprep.subr.mxu0 0.0
  %140 = vmatpush1.msra.mxu0 %v116
  %141 = vmatprep.subr.mxu0 0.0
  %142 = vmatpush1.msra.mxu0 %v115
  %143 = vmatprep.subr.mxu0 0.0
  %144 = vmatpush1.msra.mxu0 %v114
  %145 = vmatprep.subr.mxu0 0.0
  %146 = vmatpush1.msra.mxu0 %v113
  %147 = vmatprep.subr.mxu0 0.0
  %148 = vmatpush1.msra.mxu0 %v112
  %149 = vmatprep.subr.mxu0 0.0
  %150 = vmatpush1.msra.mxu0 %v111
  %151 = vmatprep.subr.mxu0 0.0
  %152 = vmatpush1.msra.mxu0 %v110
  %153 = vmatprep.subr.mxu0 0.0
  %154 = vmatpush1.msra.mxu0 %v109
  %155 = vmatprep.subr.mxu0 0.0
  %156 = vmatpush1.msra.mxu0 %v108
  %157 = vmatprep.subr.mxu0 0.0
  %158 = vmatpush1.msra.mxu0 %v107
  %159 = vmatprep.subr.mxu0 0.0
  %160 = vmatpush1.msra.mxu0 %v106
  %161 = vmatprep.subr.mxu0 0.0
  %162 = vmatpush2.msra.mxu0 0.0
  %163 = vmatprep.subr.mxu0 0.0
  %164 = vmatpush2.msra.mxu0 0.0
  %165 = vmatprep.subr.mxu0 0.0
  %166 = vmatpush2.msra.mxu0 0.0
  %167 = vmatprep.subr.mxu0 0.0
  %168 = vmatpush2.msra.mxu0 0.0
  %169 = vmatprep.subr.mxu0 0.0
  %170 = vmatpush2.msra.mxu0 0.0
  %171 = vmatprep.subr.mxu0 0.0
  %172 = vmatpush2.msra.mxu0 0.0
  %173 = vmatprep.subr.mxu0 0.0
  %174 = vmatpush2.msra.mxu0 0.0
  %175 = vmatprep.subr.mxu0 0.0
  %176 = vmatpush2.msra.mxu0 0.0
  %177 = vmatprep.subr.mxu0 0.0
  %178 = vmatpush2.msra.mxu0 0.0
  %179 = vmatprep.subr.mxu0 0.0
  %180 = vmatpush2.msra.mxu0 0.0
  %181 = vmatprep.subr.mxu0 0.0
  %182 = vmatpush2.msra.mxu0 0.0
  %183 = vmatprep.subr.mxu0 0.0
  %184 = vmatpush2.msra.mxu0 0.0
  %185 = vmatprep.subr.mxu0 0.0
  %186 = vmatpush2.msra.mxu0 0.0
  %187 = vmatprep.subr.mxu0 0.0
  %188 = vmatpush2.msra.mxu0 0.0
  %189 = vmatprep.subr.mxu0 0.0
  %190 = vmatpush2.msra.mxu0 0.0
  %191 = vmatprep.subr.mxu0 0.0
  %192 = vmatpush2.msra.mxu0 0.0
  %193 = vmatprep.mubr.f32.mxu0 0.0
  %194 = vmatmul.mubr.f32.gmra.mxu0 %v105
  %v195 = vpop.f32.mrf.mxu0
  %v196 = vadd.f32 %v127, %v195
  %v197 = vpop.f32.mrf.mxu0
  %198 = vdwg.mxu0
  %v199 = vtanh.pop %v196
  %vm200 = vcmask 31744
  %201 = vst.msk [vmem:[%s5] sm:$0xff] %vm200, %v199
  // Predicated region
  $region22: #{generator_drgcn_forward.1} parent=0 // pred_check
    _
  $region23: #{generator_drgcn_forward.1} parent=0 // pred_check_branch
    %203 = sbr.rel (0) target = $region25
  $region24: #{generator_drgcn_forward.1} parent=0 // pred_region
    _
  $region25: #{generator_drgcn_forward.1} parent=0 // pred_fallthru
    _
  // Predicated region
  $region26: #{generator_drgcn_forward.1} parent=0 // pred_check
    _
  $region27: #{generator_drgcn_forward.1} parent=0 // pred_check_branch
    %205 = sbr.rel (0) target = $region29
  $region28: #{generator_drgcn_forward.1} parent=0 // pred_region
    _
  $region29: #{generator_drgcn_forward.1} parent=0 // pred_fallthru
    _

</llo_original>
